<compile_context>
chip_gen: v7x
topology: tpu7x:2x2x1
jax: 0.10.0
libtpu: 0.0.40
codegen_flags: <defaults>
</compile_context>

<pallas_src>
import functools

import jax
import jax.numpy as jnp
from jax import lax
from jax.experimental import pallas as pl
from jax.experimental.pallas import tpu as pltpu

EPS = 1e-5


# ---------------------------------------------------------------------------
# In-kernel helpers
# ---------------------------------------------------------------------------
def _row_shift(x, direction, rows_per_img):
    """Per-image vertical conv-tap shift inside a block of stacked images.

    direction=+1 : row h receives row h-1 (top row of each image    -> zeros)
    direction=-1 : row h receives row h+1 (bottom row of each image -> zeros)
    XLU sublane roll + modulo-H edge mask == in-kernel zero padding along H,
    valid with several images stacked along the sublane axis.
    """
    rows = x.shape[0]
    rolled = pltpu.roll(x, shift=direction % rows, axis=0)
    rid = lax.broadcasted_iota(jnp.int32, x.shape, 0) % rows_per_img
    keep = (rid >= 1) if direction == 1 else (rid <= rows_per_img - 2)
    return jnp.where(keep, rolled, jnp.zeros_like(rolled))


def _conv_core(y, wb_ref, b_ref, s_ref, stat_ref, rows_per_img):
    """3x3 conv of one multi-image block y:(rows, W*C) f32, plus bias.
    Writes the bf16 conv-output slab and packed f32 BN partial sums."""
    ym1 = _row_shift(y, +1, rows_per_img)            # row h-1 (zero padded per image)
    yp1 = _row_shift(y, -1, rows_per_img)            # row h+1 (zero padded per image)
    # One fused MXU contraction over K = 3*W*C; single bf16 cast of the tap concat.
    taps = jnp.concatenate([ym1, y, yp1], axis=1).astype(jnp.bfloat16)
    s = jnp.dot(taps, wb_ref[...], preferred_element_type=jnp.float32)
    s = s + b_ref[...]                               # conv bias (broadcast row), f32
    s_ref[...] = s.astype(s_ref.dtype)               # bf16 lane-dense store
    # BN partial stats from the f32 accumulator, packed as rows 0/1 of one full
    # (8, W*C) block -> single unmasked store and single small DMA per grid step.
    psum = jnp.sum(s, axis=0, keepdims=True)
    psq = jnp.sum(s * s, axis=0, keepdims=True)
    rid = lax.broadcasted_iota(jnp.int32, stat_ref.shape, 0)
    stat_ref[...] = jnp.where(rid == 0, psum, jnp.where(rid == 1, psq, 0.0))


def conv1_kernel(x_ref, wb_ref, b_ref, s_ref, stat_ref, *, rows_per_img):
    _conv_core(x_ref[...], wb_ref, b_ref, s_ref, stat_ref, rows_per_img)


def conv2_kernel(s1_ref, a_ref, c_ref, wb_ref, b_ref, s_ref, stat_ref, *, rows_per_img):
    # Fused bn1 (affine with global batch stats) + ReLU prelude, then conv2.
    y = jnp.maximum(s1_ref[...].astype(jnp.float32) * a_ref[...] + c_ref[...], 0.0)
    _conv_core(y, wb_ref, b_ref, s_ref, stat_ref, rows_per_img)


def bn_add_relu_kernel(s2_ref, x_ref, a_ref, c_ref, o_ref):
    # bn2 (affine) + residual add + final ReLU — lane-dense elementwise f32.
    o_ref[...] = jnp.maximum(
        s2_ref[...].astype(jnp.float32) * a_ref[...] + c_ref[...] + x_ref[...], 0.0)


# ---------------------------------------------------------------------------
# Wrapper-side (pure JAX, tiny) weight / stat glue
# ---------------------------------------------------------------------------
def _band_weights(w_hwio, width):
    """(3,3,Cin,Cout) HWIO conv weights -> (3*W*Cin, W*Cout) bf16 banded matrix.

    Row block di (one per vertical tap) satisfies
      mat[di*W*Cin + (w+dj-1)*Cin + ci,  w*Cout + co] = w[di, dj, ci, co];
    input columns outside [0, W) are simply absent -> zero padding along W.
    """
    c = w_hwio.shape[2]
    mats = []
    for di in range(3):
        m = jnp.zeros((width * c, width * c), jnp.float32)
        for dj in range(3):
            m = m + jnp.kron(jnp.eye(width, k=1 - dj, dtype=jnp.float32),
                             w_hwio[di, dj].astype(jnp.float32))
        mats.append(m)
    return jnp.concatenate(mats, axis=0).astype(jnp.bfloat16)     # (3*W*C, W*C)


def _tile_row(v, width):
    return jnp.tile(v.astype(jnp.float32), width).reshape(1, -1)


def _bn_affine_rows(stats, gamma, beta, count, width, channels):
    """Per-channel mean/var from the packed per-tile partials (rows 0/1 of each (8,L)
    block), folded into a single affine bn(x) = x*a + c broadcast as (1, W*C) rows."""
    g = stats.reshape(-1, 8, width * channels)
    s = g[:, 0, :].sum(axis=0).reshape(width, channels).sum(axis=0)
    q = g[:, 1, :].sum(axis=0).reshape(width, channels).sum(axis=0)
    mean = s / count
    var = q / count - mean * mean            # biased (training-mode) variance
    scale = gamma * lax.rsqrt(var + EPS)
    shift = beta - mean * scale
    return _tile_row(scale, width), _tile_row(shift, width)


def _imgs_per_block(n_imgs, rows_per_img, target_rows=256):
    """Largest divisor of n_imgs giving ~target_rows rows per block, but keeping the
    grid length >= 2 when possible so a v7x 'parallel' grid feeds both TensorCores."""
    k = max(1, min(n_imgs, max(1, target_rows // rows_per_img)))
    while n_imgs % k:
        k -= 1
    while k > 1 and n_imgs // k < 2:
        k -= 1
        while n_imgs % k:
            k -= 1
    return k


def _pointwise_rows(m, cap=512):
    """Largest row tile (multiple of 8, <= cap) dividing m for the mem-bound stage 3."""
    for t in range(min(m, cap), 0, -1):
        if m % t == 0 and (t % 8 == 0 or t == m):
            return t
    return m


# ---------------------------------------------------------------------------
# Forward
# ---------------------------------------------------------------------------
def residual_block_forward(x_nchw, p):
    """Pallas implementation of ResidualBlock.forward (training-mode BatchNorm).
    Input/output are NCHW to match PyTorch; the boundary transposes are the only
    layout glue — everything else stays in the NHWC lane-dense slab."""
    x = jnp.transpose(x_nchw, (0, 2, 3, 1)).astype(jnp.float32)   # NCHW -> NHWC
    N, H, W, C = x.shape
    L = W * C                                 # lane width of the internal 2-D slab
    M = N * H
    count = float(N * H * W)
    x2d = x.reshape(M, L)

    wb1 = _band_weights(p["w1"], W)           # (3L, L) bf16
    wb2 = _band_weights(p["w2"], W)
    b1_row = _tile_row(p["b1"], W)            # (1, L) f32
    b2_row = _tile_row(p["b2"], W)

    k = _imgs_per_block(N, H)                 # images packed per grid step
    rows = k * H
    grid_n = N // k

    cparams = pltpu.CompilerParams(
        dimension_semantics=("parallel",),    # shard grid across v7x's 2 TCs
        vmem_limit_bytes=48 * 1024 * 1024,    # headroom under v7x's 64 MiB physical
    )

    img_spec = pl.BlockSpec((rows, L), lambda n: (n, 0))       # k images per step
    row_spec = pl.BlockSpec((1, L), lambda n: (0, 0))          # broadcast rows
    wb_spec = pl.BlockSpec((3 * L, L), lambda n: (0, 0))       # resident band weights
    stat_spec = pl.BlockSpec((8, L), lambda n: (n, 0))         # packed per-tile stats

    conv_out_shape = (
        jax.ShapeDtypeStruct((M, L), jnp.bfloat16),            # bf16 intermediate slab
        jax.ShapeDtypeStruct((grid_n * 8, L), jnp.float32),    # rows 0/1 = sum / sumsq
    )

    # --- stage 1: conv1 + bias (+ BN1 partial stats) ------------------------
    s1, st1 = pl.pallas_call(
        functools.partial(conv1_kernel, rows_per_img=H),
        out_shape=conv_out_shape,
        grid=(grid_n,),
        in_specs=[img_spec, wb_spec, row_spec],
        out_specs=(img_spec, stat_spec),
        compiler_params=cparams,
    )(x2d, wb1, b1_row)

    a1_row, c1_row = _bn_affine_rows(st1, p["g1"], p["bt1"], count, W, C)

    # --- stage 2: bn1 + relu + conv2 + bias (+ BN2 partial stats) -----------
    s2, st2 = pl.pallas_call(
        functools.partial(conv2_kernel, rows_per_img=H),
        out_shape=conv_out_shape,
        grid=(grid_n,),
        in_specs=[img_spec, row_spec, row_spec, wb_spec, row_spec],
        out_specs=(img_spec, stat_spec),
        compiler_params=cparams,
    )(s1, a1_row, c1_row, wb2, b2_row)

    a2_row, c2_row = _bn_affine_rows(st2, p["g2"], p["bt2"], count, W, C)

    # --- stage 3: bn2 + residual add + relu (mem-bound pointwise) -----------
    tpw = _pointwise_rows(M)
    pw_spec = pl.BlockSpec((tpw, L), lambda i: (i, 0))
    o2d = pl.pallas_call(
        bn_add_relu_kernel,
        out_shape=jax.ShapeDtypeStruct((M, L), jnp.float32),
        grid=(M // tpw,),
        in_specs=[pw_spec, pw_spec, row_spec, row_spec],
        out_specs=pw_spec,
        compiler_params=cparams,
    )(s2, x2d, a2_row, c2_row)

    return jnp.transpose(o2d.reshape(N, H, W, C), (0, 3, 1, 2))  # NHWC -> NCHW


# ---------------------------------------------------------------------------
# Pure-JAX reference (matches PyTorch training-mode forward)
# ---------------------------------------------------------------------------
def ref_forward(x_nchw, p):
    x = jnp.transpose(x_nchw, (0, 2, 3, 1)).astype(jnp.float32)

    def conv(z, w, b):
        return lax.conv_general_dilated(
            z, w, (1, 1), "SAME",
            dimension_numbers=("NHWC", "HWIO", "NHWC")) + b

    def bn(z, g, bt):
        m = jnp.mean(z, axis=(0, 1, 2), keepdims=True)
        v = jnp.mean((z - m) ** 2, axis=(0, 1, 2), keepdims=True)
        return (z - m) * lax.rsqrt(v + EPS) * g + bt

    y = jax.nn.relu(bn(conv(x, p["w1"], p["b1"]), p["g1"], p["bt1"]))
    z = bn(conv(y, p["w2"], p["b2"]), p["g2"], p["bt2"]) + x
    return jnp.transpose(jax.nn.relu(z), (0, 3, 1, 2))


if __name__ == "__main__":
    # TODO(synk): BatchNorm running_mean/running_var buffer updates (training-time side
    # effect on module state) are not modeled; the forward value does not depend on them.
    key = jax.random.PRNGKey(0)
    N, C, H, W = 4, 8, 16, 16          # W*C = 128 -> exactly one vreg lane width;
                                       # N=4 exercises multi-image packing (2 per block).
    ks = jax.random.split(key, 9)

    x = jax.random.normal(ks[0], (N, C, H, W), jnp.float32)
    scale = 1.0 / jnp.sqrt(9.0 * C)
    params = dict(
        w1=jax.random.normal(ks[1], (3, 3, C, C), jnp.float32) * scale,   # HWIO
        b1=0.1 * jax.random.normal(ks[2], (C,), jnp.float32),
        g1=1.0 + 0.1 * jax.random.normal(ks[3], (C,), jnp.float32),
        bt1=0.1 * jax.random.normal(ks[4], (C,), jnp.float32),
        w2=jax.random.normal(ks[5], (3, 3, C, C), jnp.float32) * scale,
        b2=0.1 * jax.random.normal(ks[6], (C,), jnp.float32),
        g2=1.0 + 0.1 * jax.random.normal(ks[7], (C,), jnp.float32),
        bt2=0.1 * jax.random.normal(ks[8], (C,), jnp.float32),
    )

    out = jax.block_until_ready(residual_block_forward(x, params))
    ref = jax.block_until_ready(ref_forward(x, params))

    assert out.shape == x.shape and out.dtype == jnp.float32
    # bf16 MXU matmuls + bf16 intermediate slabs vs the all-f32 XLA reference:
    # tolerances sized for two convs' worth of bf16 rounding through training-mode BN.
    max_err = float(jnp.max(jnp.abs(out - ref)))
    rel_err = float(jnp.linalg.norm(out - ref) / jnp.linalg.norm(ref))
    assert max_err < 0.25 and rel_err < 0.06, f"mismatch vs reference: {max_err} / {rel_err}"
    print("KERNEL_OK")
</pallas_src>

<mosaic_0001>
module attributes {stable_mosaic.version = 11 : i64} {
  func.func @conv1_kernel(%arg0: i32, %arg1: memref<32x128xf32, #tpu.memory_space<vmem>>, %arg2: memref<384x128xbf16, #tpu.memory_space<vmem>>, %arg3: memref<1x128xf32, #tpu.memory_space<vmem>>, %arg4: memref<32x128xbf16, #tpu.memory_space<vmem>>, %arg5: memref<8x128xf32, #tpu.memory_space<vmem>>) attributes {dimension_semantics = [#tpu.dimension_semantics<parallel>], iteration_bounds = array<i64: 2>, scalar_prefetch = 0 : i64, scratch_operands = 0 : i64, tpu.core_type = #tpu.core_type<tc>, window_params = [{transform_indices = @transform_0, window_bounds = array<i64: 32, 128>}, {pipeline_mode = #tpu.pipeline_mode<synchronous>, transform_indices = @transform_1, window_bounds = array<i64: 384, 128>}, {pipeline_mode = #tpu.pipeline_mode<synchronous>, transform_indices = @transform_2, window_bounds = array<i64: 1, 128>}, {transform_indices = @transform_3, window_bounds = array<i64: 32, 128>}, {transform_indices = @transform_4, window_bounds = array<i64: 8, 128>}]} {
    %c0 = arith.constant 0 : index
    %c0_0 = arith.constant 0 : index
    %0 = vector.load %arg1[%c0, %c0_0] : memref<32x128xf32, #tpu.memory_space<vmem>>, vector<32x128xf32>
    %c1_i32 = arith.constant 1 : i32
    %1 = tpu.dynamic_rotate %0 by %c1_i32 dim 0 : vector<32x128xf32>, i32 -> vector<32x128xf32>
    %2 = tpu.iota {dimensions = array<i32: 0>} : vector<32x128xi32>
    %c16_i32 = arith.constant 16 : i32
    %c0_i32 = arith.constant 0 : i32
    %3 = arith.cmpi eq, %c16_i32, %c0_i32 : i32
    %c1_i32_1 = arith.constant 1 : i32
    %4 = arith.select %3, %c1_i32_1, %c16_i32 : i32
    %5 = vector.broadcast %4 : i32 to vector<32x128xi32>
    %6 = arith.remsi %2, %5 : vector<32x128xi32>
    %c0_i32_2 = arith.constant 0 : i32
    %7 = vector.broadcast %c0_i32_2 : i32 to vector<32x128xi32>
    %8 = arith.cmpi ne, %6, %7 : vector<32x128xi32>
    %c0_i32_3 = arith.constant 0 : i32
    %9 = vector.broadcast %c0_i32_3 : i32 to vector<32x128xi32>
    %10 = arith.cmpi slt, %6, %9 : vector<32x128xi32>
    %c0_i32_4 = arith.constant 0 : i32
    %11 = arith.cmpi slt, %4, %c0_i32_4 : i32
    %12 = vector.broadcast %11 : i1 to vector<32x128xi1>
    %13 = vector.broadcast %12 : vector<32x128xi1> to vector<32x128xi1>
    %14 = arith.xori %10, %13 : vector<32x128xi1>
    %15 = arith.andi %14, %8 : vector<32x128xi1>
    %16 = vector.broadcast %4 : i32 to vector<32x128xi32>
    %17 = arith.addi %6, %16 : vector<32x128xi32>
    %18 = arith.select %15, %17, %6 : vector<32x128xi1>, vector<32x128xi32>
    %c1_i32_5 = arith.constant 1 : i32
    %19 = vector.broadcast %c1_i32_5 : i32 to vector<32x128xi32>
    %20 = arith.cmpi sge, %18, %19 : vector<32x128xi32>
    %cst = arith.constant 0.000000e+00 : f32
    %21 = vector.broadcast %cst : f32 to vector<32x128xf32>
    %22 = arith.select %20, %1, %21 : vector<32x128xi1>, vector<32x128xf32>
    %c31_i32 = arith.constant 31 : i32
    %23 = tpu.dynamic_rotate %0 by %c31_i32 dim 0 : vector<32x128xf32>, i32 -> vector<32x128xf32>
    %24 = tpu.iota {dimensions = array<i32: 0>} : vector<32x128xi32>
    %c16_i32_6 = arith.constant 16 : i32
    %c0_i32_7 = arith.constant 0 : i32
    %25 = arith.cmpi eq, %c16_i32_6, %c0_i32_7 : i32
    %c1_i32_8 = arith.constant 1 : i32
    %26 = arith.select %25, %c1_i32_8, %c16_i32_6 : i32
    %27 = vector.broadcast %26 : i32 to vector<32x128xi32>
    %28 = arith.remsi %24, %27 : vector<32x128xi32>
    %c0_i32_9 = arith.constant 0 : i32
    %29 = vector.broadcast %c0_i32_9 : i32 to vector<32x128xi32>
    %30 = arith.cmpi ne, %28, %29 : vector<32x128xi32>
    %c0_i32_10 = arith.constant 0 : i32
    %31 = vector.broadcast %c0_i32_10 : i32 to vector<32x128xi32>
    %32 = arith.cmpi slt, %28, %31 : vector<32x128xi32>
    %c0_i32_11 = arith.constant 0 : i32
    %33 = arith.cmpi slt, %26, %c0_i32_11 : i32
    %34 = vector.broadcast %33 : i1 to vector<32x128xi1>
    %35 = vector.broadcast %34 : vector<32x128xi1> to vector<32x128xi1>
    %36 = arith.xori %32, %35 : vector<32x128xi1>
    %37 = arith.andi %36, %30 : vector<32x128xi1>
    %38 = vector.broadcast %26 : i32 to vector<32x128xi32>
    %39 = arith.addi %28, %38 : vector<32x128xi32>
    %40 = arith.select %37, %39, %28 : vector<32x128xi1>, vector<32x128xi32>
    %c14_i32 = arith.constant 14 : i32
    %41 = vector.broadcast %c14_i32 : i32 to vector<32x128xi32>
    %42 = arith.cmpi sle, %40, %41 : vector<32x128xi32>
    %cst_12 = arith.constant 0.000000e+00 : f32
    %43 = vector.broadcast %cst_12 : f32 to vector<32x128xf32>
    %44 = arith.select %42, %23, %43 : vector<32x128xi1>, vector<32x128xf32>
    %45 = tpu.concatenate %22, %0, %44 in 1 : vector<32x128xf32>, vector<32x128xf32>, vector<32x128xf32> -> vector<32x384xf32>
    %46 = arith.truncf %45 : vector<32x384xf32> to vector<32x384xbf16>
    %c0_13 = arith.constant 0 : index
    %c0_14 = arith.constant 0 : index
    %47 = vector.load %arg2[%c0_13, %c0_14] : memref<384x128xbf16, #tpu.memory_space<vmem>>, vector<384x128xbf16>
    %cst_15 = arith.constant dense<0.000000e+00> : vector<32x128xf32>
    %48 = tpu.matmul %46, %47, %cst_15 {dimension_numbers = #tpu.dot_dimension_numbers<[1], [0], [0], [1], [0, 0, 1, 1], [], []>} : vector<32x384xbf16>, vector<384x128xbf16>, vector<32x128xf32> -> vector<32x128xf32>
    %c0_16 = arith.constant 0 : index
    %c0_17 = arith.constant 0 : index
    %49 = vector.load %arg3[%c0_16, %c0_17] : memref<1x128xf32, #tpu.memory_space<vmem>>, vector<1x128xf32>
    %50 = vector.broadcast %49 : vector<1x128xf32> to vector<32x128xf32>
    %51 = arith.addf %48, %50 : vector<32x128xf32>
    %52 = arith.truncf %51 : vector<32x128xf32> to vector<32x128xbf16>
    %c0_18 = arith.constant 0 : index
    %c0_19 = arith.constant 0 : index
    %53 = vector.load %arg4[%c0_18, %c0_19] : memref<32x128xbf16, #tpu.memory_space<vmem>>, vector<32x128xbf16>
    tpu.vector_store %arg4[%c0_18, %c0_19], %52 {strides = array<i32>} : memref<32x128xbf16, #tpu.memory_space<vmem>>, vector<32x128xbf16>,
    %cst_20 = arith.constant dense<0.000000e+00> : vector<128xf32>
    %54 = vector.multi_reduction <add>, %51, %cst_20 [0] : vector<32x128xf32> to vector<128xf32>
    %55 = vector.shape_cast %54 : vector<128xf32> to vector<1x128xf32>
    %56 = arith.mulf %51, %51 : vector<32x128xf32>
    %cst_21 = arith.constant dense<0.000000e+00> : vector<128xf32>
    %57 = vector.multi_reduction <add>, %56, %cst_21 [0] : vector<32x128xf32> to vector<128xf32>
    %58 = vector.shape_cast %57 : vector<128xf32> to vector<1x128xf32>
    %59 = tpu.iota {dimensions = array<i32: 0>} : vector<8x128xi32>
    %c0_i32_22 = arith.constant 0 : i32
    %60 = vector.broadcast %c0_i32_22 : i32 to vector<8x128xi32>
    %61 = arith.cmpi eq, %59, %60 : vector<8x128xi32>
    %c1_i32_23 = arith.constant 1 : i32
    %62 = vector.broadcast %c1_i32_23 : i32 to vector<8x128xi32>
    %63 = arith.cmpi eq, %59, %62 : vector<8x128xi32>
    %cst_24 = arith.constant 0.000000e+00 : f32
    %64 = vector.shape_cast %58 : vector<1x128xf32> to vector<1x128xf32>
    %65 = vector.broadcast %64 : vector<1x128xf32> to vector<8x128xf32>
    %66 = vector.broadcast %cst_24 : f32 to vector<8x128xf32>
    %67 = arith.select %63, %65, %66 : vector<8x128xi1>, vector<8x128xf32>
    %68 = vector.shape_cast %55 : vector<1x128xf32> to vector<1x128xf32>
    %69 = vector.broadcast %68 : vector<1x128xf32> to vector<8x128xf32>
    %70 = arith.select %61, %69, %67 : vector<8x128xi1>, vector<8x128xf32>
    %c0_25 = arith.constant 0 : index
    %c0_26 = arith.constant 0 : index
    %71 = vector.load %arg5[%c0_25, %c0_26] : memref<8x128xf32, #tpu.memory_space<vmem>>, vector<8x128xf32>
    tpu.vector_store %arg5[%c0_25, %c0_26], %70 {strides = array<i32>} : memref<8x128xf32, #tpu.memory_space<vmem>>, vector<8x128xf32>,
    return
  }
  func.func @transform_0(%arg0: i32) -> (i32, i32) {
    %c0_i32 = arith.constant 0 : i32
    %c0_i32_0 = arith.constant 0 : i32
    return %arg0, %c0_i32 : i32, i32
  }
  func.func @transform_1(%arg0: i32) -> (i32, i32) {
    %c0_i32 = arith.constant 0 : i32
    %c0_i32_0 = arith.constant 0 : i32
    %c0_i32_1 = arith.constant 0 : i32
    return %c0_i32, %c0_i32_0 : i32, i32
  }
  func.func @transform_2(%arg0: i32) -> (i32, i32) {
    %c0_i32 = arith.constant 0 : i32
    %c0_i32_0 = arith.constant 0 : i32
    %c0_i32_1 = arith.constant 0 : i32
    return %c0_i32, %c0_i32_0 : i32, i32
  }
  func.func @transform_3(%arg0: i32) -> (i32, i32) {
    %c0_i32 = arith.constant 0 : i32
    %c0_i32_0 = arith.constant 0 : i32
    return %arg0, %c0_i32 : i32, i32
  }
  func.func @transform_4(%arg0: i32) -> (i32, i32) {
    %c0_i32 = arith.constant 0 : i32
    %c0_i32_0 = arith.constant 0 : i32
    return %arg0, %c0_i32 : i32, i32
  }
}

</mosaic_0001>

<llo_original>
// kernel: tpu_custom_call.1
$region0: #{tpu_custom_call.1}
  #allocation0 [shape = 'u32[]', space=smem, size = 0x4, offset = 0x4, fixed_abs, tag = 'smem constant byte address 0x4 - core index']
  #allocation1 [shape = 'u32[144,128]{1,0:T(1,128)}', space=vmem, size = 0x12000, scoped, tag = 'internal scratch']
  %s0 = inlined_call_operand.hbm [shape: f32[64,128], index: 0, kind: input, shape index: {}]
  %s1 = inlined_call_operand.hbm [shape: bf16[384,128], index: 1, kind: input, shape index: {}]
  %s2 = inlined_call_operand.vmem [shape: f32[1,128], index: 2, kind: input, shape index: {}]
  %s3 = inlined_call_operand.hbm [shape: bf16[64,128], index: 3, kind: output, shape index: {0}]
  %s4 = inlined_call_operand.hbm [shape: f32[16,128], index: 4, kind: output, shape index: {1}]
  %5 = xla_tuple %s3, %s4
  %s6 = sld [smem:[#allocation0]]
  $region61: #{tpu_custom_call.1} parent=0
    _
  %s8 = ssub.s32 1, %s6
  %s9 = scalar_select 0, %s8, %s6
  $region1: #{tpu_custom_call.1} parent=0
    #allocation2 [shape = 'u8[32768]{0}', space=vmem, size = 0x8000, scoped, tag = 'input window, operand 0']
    #allocation3 [shape = 's32[2]{0}', space=sflag, size = 0x8, scoped, tag = 'scoped memory for tpu_custom_call.1']
    #allocation4 [shape = 's32[2]{0}', space=sflag, size = 0x8, scoped, tag = 'scoped memory for tpu_custom_call.1']
    #allocation5 [shape = 'u8[98304]{0}', space=vmem, size = 0x18000, scoped, tag = 'input window, operand 1, single buffered']
    #allocation6 [shape = 's32[1]{0}', space=sflag, size = 0x4, scoped, tag = 'scoped memory for tpu_custom_call.1']
    #allocation7 [shape = 'u8[16384]{0}', space=vmem, size = 0x4000, scoped, tag = 'output window, operand 0']
    #allocation8 [shape = 'u8[8192]{0}', space=vmem, size = 0x2000, scoped, tag = 'output window, operand 1']
    #allocation9 [shape = 's32[2]{0}', space=sflag, size = 0x8, scoped, tag = 'scoped memory for tpu_custom_call.1']
    %10 = vsyncpa [#allocation3], 0
    %s11 = scalar_lea.sflag [#allocation3], 1
    %12 = vsyncpa %s11, 0
    %13 = vsyncpa [#allocation6], 0
    %14 = vsyncpa [#allocation4], 0
    %s15 = scalar_lea.sflag [#allocation4], 1
    %16 = vsyncpa %s15, 0
    %17 = vsyncpa [#allocation9], 0
    %s18 = scalar_lea.sflag [#allocation9], 1
    %19 = vsyncpa %s18, 0
    loop: start=0, step=1, limit=4
    $region2: #{tpu_custom_call.1} parent=1 // loop_pre_header
      _
    $region3: #{tpu_custom_call.1} parent=1 // loop_header
      %s21 = sphi 0, %s25
      %p22 = scmp.ge.s32.totalorder %s21, 4
      %s31 = sphi 0, %s33
      %s34 = sphi 0, %s31
      %s35 = sphi 0, %s34
      %s51 = sphi 0, %s35
      %s55 = sphi 0, %s55
      %s57 = sphi 0, %s55
      %s58 = sphi 0, %s57
      %s72 = sphi 0, %s58
      %s76 = sphi 0, %s76
      %s78 = sphi 0, %s76
      %s79 = sphi 0, %s78
      %s93 = sphi 0, %s79
      %s99 = sphi 0, %s101
      %s102 = sphi 0, %s99
      %s103 = sphi 0, %s102
      %s119 = sphi 0, %s103
      %s125 = sphi 0, %s127
      %s128 = sphi 0, %s125
      %s129 = sphi 0, %s128
      %s145 = sphi 0, %s129
    $region4: #{tpu_custom_call.1} parent=1 // loop_header_branch
      %24 = sbr.rel (%p22) target = $region8
    $region5: #{tpu_custom_call.1} parent=1 // loop_body
      %s26 = ssub.s32 %s21, 1
      %s27 = ssub.s32 %s21, 2
      %s28 = sadd.s32 %s21, 1
      %s29 = ssub.s32 %s21, %s28
      %p30 = scmp.eq.s32.totalorder %s29, 0
      %s32 = sadd.s32 %s31, 1
      %s33 = scalar_select %p30, %s31, %s32
      %p36 = pneg %p30
      %p37 = scmp.eq.s32.totalorder %s21, 1
      %p38 = por %p36, %p37
      %p39 = scmp.ne.s32.totalorder %s31, %s34
      %p40 = scmp.eq.s32.totalorder %s21, 0
      %p41 = por %p39, %p40
      %p42 = scmp.ne.s32.totalorder %s31, %s34
      %p43 = scmp.eq.s32.totalorder %s26, 1
      %p44 = por %p42, %p43
      %p45 = scmp.ne.s32.totalorder %s34, %s35
      %p46 = scmp.eq.s32.totalorder %s26, 0
      %p47 = por %p45, %p46
      %p48 = scmp.ne.s32.totalorder %s34, %s35
      %p49 = scmp.eq.s32.totalorder %s27, 1
      %p50 = por %p48, %p49
      %p52 = scmp.ne.s32.totalorder %s35, %s51
      %p53 = scmp.eq.s32.totalorder %s27, 0
      %p54 = por %p52, %p53
      %s56 = sadd.s32 %s55, 1
      %p59 = scmp.eq.s32.totalorder %s21, 1
      %p60 = scmp.ne.s32.totalorder %s55, %s57
      %p61 = scmp.eq.s32.totalorder %s21, 0
      %p62 = por %p60, %p61
      %p63 = scmp.ne.s32.totalorder %s55, %s57
      %p64 = scmp.eq.s32.totalorder %s26, 1
      %p65 = por %p63, %p64
      %p66 = scmp.ne.s32.totalorder %s57, %s58
      %p67 = scmp.eq.s32.totalorder %s26, 0
      %p68 = por %p66, %p67
      %p69 = scmp.ne.s32.totalorder %s57, %s58
      %p70 = scmp.eq.s32.totalorder %s27, 1
      %p71 = por %p69, %p70
      %p73 = scmp.ne.s32.totalorder %s58, %s72
      %p74 = scmp.eq.s32.totalorder %s27, 0
      %p75 = por %p73, %p74
      %s77 = sadd.s32 %s76, 1
      %p80 = scmp.eq.s32.totalorder %s21, 1
      %p81 = scmp.ne.s32.totalorder %s76, %s78
      %p82 = scmp.eq.s32.totalorder %s21, 0
      %p83 = por %p81, %p82
      %p84 = scmp.ne.s32.totalorder %s76, %s78
      %p85 = scmp.eq.s32.totalorder %s26, 1
      %p86 = por %p84, %p85
      %p87 = scmp.ne.s32.totalorder %s78, %s79
      %p88 = scmp.eq.s32.totalorder %s26, 0
      %p89 = por %p87, %p88
      %p90 = scmp.ne.s32.totalorder %s78, %s79
      %p91 = scmp.eq.s32.totalorder %s27, 1
      %p92 = por %p90, %p91
      %p94 = scmp.ne.s32.totalorder %s79, %s93
      %p95 = scmp.eq.s32.totalorder %s27, 0
      %p96 = por %p94, %p95
      %s97 = ssub.s32 %s21, %s28
      %p98 = scmp.eq.s32.totalorder %s97, 0
      %s100 = sadd.s32 %s99, 1
      %s101 = scalar_select %p98, %s99, %s100
      %p104 = pneg %p98
      %p105 = scmp.eq.s32.totalorder %s21, 1
      %p106 = por %p104, %p105
      %p107 = scmp.ne.s32.totalorder %s99, %s102
      %p108 = scmp.eq.s32.totalorder %s21, 0
      %p109 = por %p107, %p108
      %p110 = scmp.ne.s32.totalorder %s99, %s102
      %p111 = scmp.eq.s32.totalorder %s26, 1
      %p112 = por %p110, %p111
      %p113 = scmp.ne.s32.totalorder %s102, %s103
      %p114 = scmp.eq.s32.totalorder %s26, 0
      %p115 = por %p113, %p114
      %p116 = scmp.ne.s32.totalorder %s102, %s103
      %p117 = scmp.eq.s32.totalorder %s27, 1
      %p118 = por %p116, %p117
      %p120 = scmp.ne.s32.totalorder %s103, %s119
      %p121 = scmp.eq.s32.totalorder %s27, 0
      %p122 = por %p120, %p121
      %s123 = ssub.s32 %s21, %s28
      %p124 = scmp.eq.s32.totalorder %s123, 0
      %s126 = sadd.s32 %s125, 1
      %s127 = scalar_select %p124, %s125, %s126
      %p130 = pneg %p124
      %p131 = scmp.eq.s32.totalorder %s21, 1
      %p132 = por %p130, %p131
      %p133 = scmp.ne.s32.totalorder %s125, %s128
      %p134 = scmp.eq.s32.totalorder %s21, 0
      %p135 = por %p133, %p134
      %p136 = scmp.ne.s32.totalorder %s125, %s128
      %p137 = scmp.eq.s32.totalorder %s26, 1
      %p138 = por %p136, %p137
      %p139 = scmp.ne.s32.totalorder %s128, %s129
      %p140 = scmp.eq.s32.totalorder %s26, 0
      %p141 = por %p139, %p140
      %p142 = scmp.ne.s32.totalorder %s128, %s129
      %p143 = scmp.eq.s32.totalorder %s27, 1
      %p144 = por %p142, %p143
      %p146 = scmp.ne.s32.totalorder %s129, %s145
      %p147 = scmp.eq.s32.totalorder %s27, 0
      %p148 = por %p146, %p147
      %p149 = scmp.le.s32.totalorder 1, %s21
      %p150 = scmp.lt.s32.totalorder %s21, 3
      %p151 = pnand %p149, %p150
      %p152 = pneg %p151
      // Predicated region
      $region9: #{tpu_custom_call.1} parent=5 // pred_check
        _
      $region10: #{tpu_custom_call.1} parent=5 // pred_check_branch
        %154 = sbr.rel (%p151) target = $region12
      $region11: #{tpu_custom_call.1} parent=5 // pred_region
        %s155 = ssub.s32 %s21, 1
        // Predicated region
        $region13: #{tpu_custom_call.1} parent=11 // pred_check
          %p156 = pneg %p68
        $region14: #{tpu_custom_call.1} parent=11 // pred_check_branch
          %158 = sbr.rel (%p156) target = $region16
        $region15: #{tpu_custom_call.1} parent=11 // pred_region
          %s160 = ssub.s32 3072, 3072
          %161 = vsyncadd [#allocation6], %s160
          %s162 = sshll.u32 [#allocation5], 4
          %s163 = int_to_ptr.vmem [resolvable:$true] %s162
          %168 = dma.hbm_to_vmem [thread:$0]  %s1, 3072, %s163, [#allocation6], 64, 64, 4
        $region16: #{tpu_custom_call.1} parent=11 // pred_fallthru
          _
        // Predicated region
        $region17: #{tpu_custom_call.1} parent=11 // pred_check
          %p169 = pneg %p89
        $region18: #{tpu_custom_call.1} parent=11 // pred_check_branch
          %171 = sbr.rel (%p169) target = $region20
        $region19: #{tpu_custom_call.1} parent=11 // pred_region
          _
        $region20: #{tpu_custom_call.1} parent=11 // pred_fallthru
          _
      $region12: #{tpu_custom_call.1} parent=5 // pred_fallthru
        _
      %p172 = scmp.lt.s32.totalorder %s21, 2
      // Predicated region
      $region21: #{tpu_custom_call.1} parent=5 // pred_check
        %p173 = pneg %p172
      $region22: #{tpu_custom_call.1} parent=5 // pred_check_branch
        %175 = sbr.rel (%p173) target = $region24
      $region23: #{tpu_custom_call.1} parent=5 // pred_region
        // Predicated region
        $region25: #{tpu_custom_call.1} parent=23 // pred_check
          %p176 = pneg %p41
        $region26: #{tpu_custom_call.1} parent=23 // pred_check_branch
          %178 = sbr.rel (%p176) target = $region28
        $region27: #{tpu_custom_call.1} parent=23 // pred_region
          %s179 = sand.u32 %s31, 1
          %s180 = scalar_lea.sflag [#allocation3], %s179
          %s181 = sand.u32 %s31, 1
          %s182 = smul.addr %s181, 32
          %s183 = scalar_lea.vmem [#allocation2], %s182
          %s184 = smul.u32 4, %s21
          %s186 = ssub.s32 512, 512
          %187 = vsyncadd %s180, %s186
          %s188 = smul.addr %s184, 128
          %s189 = scalar_lea.hbm %s0, %s188
          %s190 = sshll.u32 %s183, 4
          %s191 = int_to_ptr.vmem [resolvable:$true] %s190
          %196 = dma.hbm_to_vmem [thread:$0]  %s189, 512, %s191, %s180, 128, 128, 8
        $region28: #{tpu_custom_call.1} parent=23 // pred_fallthru
          _
      $region24: #{tpu_custom_call.1} parent=5 // pred_fallthru
        _
      %p197 = scmp.le.s32.totalorder 1, %s21
      %p198 = scmp.lt.s32.totalorder %s21, 3
      %p199 = pnand %p197, %p198
      %p200 = pneg %p199
      // Predicated region
      $region29: #{tpu_custom_call.1} parent=5 // pred_check
        _
      $region30: #{tpu_custom_call.1} parent=5 // pred_check_branch
        %202 = sbr.rel (%p199) target = $region32
      $region31: #{tpu_custom_call.1} parent=5 // pred_region
        %s203 = ssub.s32 %s21, 1
        %s204 = sand.u32 %s34, 1
        %s205 = scalar_lea.sflag [#allocation3], %s204
        %s206 = sand.u32 %s34, 1
        %s207 = smul.addr %s206, 32
        %s208 = scalar_lea.vmem [#allocation2], %s207
        // Predicated region
        $region33: #{tpu_custom_call.1} parent=31 // pred_check
          %p209 = pneg %p47
        $region34: #{tpu_custom_call.1} parent=31 // pred_check_branch
          %211 = sbr.rel (%p209) target = $region36
        $region35: #{tpu_custom_call.1} parent=31 // pred_region
          %212 = dma.done %s205, 512
        $region36: #{tpu_custom_call.1} parent=31 // pred_fallthru
          _
        // Predicated region
        $region37: #{tpu_custom_call.1} parent=31 // pred_check
          %p213 = pneg %p68
        $region38: #{tpu_custom_call.1} parent=31 // pred_check_branch
          %215 = sbr.rel (%p213) target = $region40
        $region39: #{tpu_custom_call.1} parent=31 // pred_region
          %216 = dma.done [#allocation6], 3072
        $region40: #{tpu_custom_call.1} parent=31 // pred_fallthru
          _
        %s217 = sand.u32 %s34, 1
        %s218 = scalar_lea.sflag [#allocation3], %s217
        %s219 = sand.u32 %s34, 1
        %s220 = smul.addr %s219, 32
        %s221 = scalar_lea.vmem [#allocation2], %s220
        %p222 = pneg %p47
        %p223 = pneg %p44
        %p224 = pneg %p68
        %p225 = pneg %p65
        %p226 = pneg %p89
        %p227 = pneg %p86
        %p228 = pneg %p115
        %p229 = pneg %p112
        %s230 = sand.u32 %s102, 1
        %s231 = scalar_lea.sflag [#allocation4], %s230
        %s232 = sand.u32 %s102, 1
        %s233 = smul.addr %s232, 16
        %s234 = scalar_lea.vmem [#allocation7], %s233
        %p235 = pneg %p141
        %p236 = pneg %p138
        %s237 = sand.u32 %s128, 1
        %s238 = scalar_lea.sflag [#allocation9], %s237
        %s239 = sand.u32 %s128, 1
        %s240 = smul.addr %s239, 8
        %s241 = scalar_lea.vmem [#allocation8], %s240
        %s242 = smul.u32 4, %s26
        %s243 = smul.u32 4, %s26
        %v245 = vld [vmem:[%s208] sm:$0xff]
        %v246 = vld [vmem:[%s208 + $0x8] sm:$0xff]
        %v247 = vld [vmem:[%s208 + $0x10] sm:$0xff]
        %v248 = vld [vmem:[%s208 + $0x18] sm:$0xff]
        %v249 = vrot.slane %v245, 7
        %v250 = vrot.slane %v246, 7
        %v251 = vrot.slane %v247, 7
        %v252 = vrot.slane %v248, 7
        %v253 = vlaneseq
        %v254 = vshrl.u32 %v253, 7
        %vm255 = vcmp.lt.s32.totalorder %v254, 1
        %v256 = vsel %vm255, %v251, %v252
        %v257 = vsel %vm255, %v250, %v251
        %v258 = vsel %vm255, %v249, %v250
        %v259 = vsel %vm255, %v252, %v249
        %v260 = vadd.s32 %v254, 8
        %v261 = vadd.s32 %v254, 16
        %v262 = vadd.s32 %v254, 24
        %vm263 = vcmp.lt.s32.totalorder %v254, 0
        %v264 = vsub.s32 0, %v254
        %v265 = vsel %vm263, %v264, %v254
        %v266 = vshrl.u32 %v265, 4
        %v267 = vand.u32 %v265, 15
        %v268 = vsub.s32 0, %v267
        %v269 = vsel %vm263, %v268, %v267
        %vm270 = vcmp.lt.s32.totalorder %v260, 0
        %v271 = vsub.s32 0, %v260
        %v272 = vsel %vm270, %v271, %v260
        %v273 = vshrl.u32 %v272, 4
        %v274 = vand.u32 %v272, 15
        %v275 = vsub.s32 0, %v274
        %v276 = vsel %vm270, %v275, %v274
        %vm277 = vcmp.lt.s32.totalorder %v261, 0
        %v278 = vsub.s32 0, %v261
        %v279 = vsel %vm277, %v278, %v261
        %v280 = vshrl.u32 %v279, 4
        %v281 = vand.u32 %v279, 15
        %v282 = vsub.s32 0, %v281
        %v283 = vsel %vm277, %v282, %v281
        %vm284 = vcmp.lt.s32.totalorder %v262, 0
        %v285 = vsub.s32 0, %v262
        %v286 = vsel %vm284, %v285, %v262
        %v287 = vshrl.u32 %v286, 4
        %v288 = vand.u32 %v286, 15
        %v289 = vsub.s32 0, %v288
        %v290 = vsel %vm284, %v289, %v288
        %vm291 = vcmp.ne.s32.totalorder %v269, 0
        %vm292 = vcmp.ne.s32.totalorder %v276, 0
        %vm293 = vcmp.ne.s32.totalorder %v283, 0
        %vm294 = vcmp.ne.s32.totalorder %v290, 0
        %vm295 = vcmp.lt.s32.totalorder %v269, 0
        %vm296 = vcmp.lt.s32.totalorder %v276, 0
        %vm297 = vcmp.lt.s32.totalorder %v283, 0
        %vm298 = vcmp.lt.s32.totalorder %v290, 0
        %vm299 = vmand %vm295, %vm291
        %vm300 = vmand %vm296, %vm292
        %vm301 = vmand %vm297, %vm293
        %vm302 = vmand %vm298, %vm294
        %v303 = vadd.s32 %v269, 16
        %v304 = vadd.s32 %v276, 16
        %v305 = vadd.s32 %v283, 16
        %v306 = vadd.s32 %v290, 16
        %v307 = vsel %vm299, %v303, %v269
        %v308 = vsel %vm300, %v304, %v276
        %v309 = vsel %vm301, %v305, %v283
        %v310 = vsel %vm302, %v306, %v290
        %vm311 = vcmp.ge.s32.totalorder %v307, 1
        %vm312 = vcmp.ge.s32.totalorder %v308, 1
        %vm313 = vcmp.ge.s32.totalorder %v309, 1
        %vm314 = vcmp.ge.s32.totalorder %v310, 1
        %v315 = vsel %vm311, %v259, 0.0
        %v316 = vsel %vm312, %v258, 0.0
        %v317 = vsel %vm313, %v257, 0.0
        %v318 = vsel %vm314, %v256, 0.0
        %v319 = vrot.slane %v245, 1
        %v320 = vrot.slane %v246, 1
        %v321 = vrot.slane %v247, 1
        %v322 = vrot.slane %v248, 1
        %vm323 = vcmp.lt.s32.totalorder %v254, 7
        %v324 = vsel %vm323, %v321, %v322
        %v325 = vsel %vm323, %v320, %v321
        %v326 = vsel %vm323, %v319, %v320
        %v327 = vsel %vm323, %v322, %v319
        %vm328 = vcmp.le.s32.totalorder %v307, 14
        %vm329 = vcmp.le.s32.totalorder %v308, 14
        %vm330 = vcmp.le.s32.totalorder %v309, 14
        %vm331 = vcmp.le.s32.totalorder %v310, 14
        %v332 = vsel %vm328, %v326, 0.0
        %v333 = vsel %vm329, %v325, 0.0
        %v334 = vsel %vm330, %v324, 0.0
        %v335 = vsel %vm331, %v327, 0.0
        %v336 = vpack.c.bf16 %v316, %v315
        %v337 = vpack.c.bf16 %v246, %v245
        %v338 = vpack.c.bf16 %v333, %v332
        %v339 = vpack.c.bf16 %v318, %v317
        %v340 = vpack.c.bf16 %v248, %v247
        %v341 = vpack.c.bf16 %v335, %v334
        %v342 = vld [vmem:[#allocation5] sm:$0xf]
        %v343 = vld [vmem:[#allocation5 + $0x4] sm:$0xf]
        %v344 = vld [vmem:[#allocation5 + $0x8] sm:$0xf]
        %v345 = vld [vmem:[#allocation5 + $0xc] sm:$0xf]
        %v346 = vld [vmem:[#allocation5 + $0x10] sm:$0xf]
        %v347 = vld [vmem:[#allocation5 + $0x14] sm:$0xf]
        %v348 = vld [vmem:[#allocation5 + $0x18] sm:$0xf]
        %v349 = vld [vmem:[#allocation5 + $0x1c] sm:$0xf]
        %v350 = vld [vmem:[#allocation5 + $0x20] sm:$0xf]
        %v351 = vld [vmem:[#allocation5 + $0x24] sm:$0xf]
        %v352 = vld [vmem:[#allocation5 + $0x28] sm:$0xf]
        %v353 = vld [vmem:[#allocation5 + $0x2c] sm:$0xf]
        %v354 = vld [vmem:[#allocation5 + $0x30] sm:$0xf]
        %v355 = vld [vmem:[#allocation5 + $0x34] sm:$0xf]
        %v356 = vld [vmem:[#allocation5 + $0x38] sm:$0xf]
        %v357 = vld [vmem:[#allocation5 + $0x3c] sm:$0xf]
        %v358 = vld [vmem:[#allocation5 + $0x40] sm:$0xf]
        %v359 = vld [vmem:[#allocation5 + $0x44] sm:$0xf]
        %v360 = vld [vmem:[#allocation5 + $0x48] sm:$0xf]
        %v361 = vld [vmem:[#allocation5 + $0x4c] sm:$0xf]
        %v362 = vld [vmem:[#allocation5 + $0x50] sm:$0xf]
        %v363 = vld [vmem:[#allocation5 + $0x54] sm:$0xf]
        %v364 = vld [vmem:[#allocation5 + $0x58] sm:$0xf]
        %v365 = vld [vmem:[#allocation5 + $0x5c] sm:$0xf]
        %v366 = vld [vmem:[#allocation5 + $0x60] sm:$0xf]
        %v367 = vld [vmem:[#allocation5 + $0x64] sm:$0xf]
        %v368 = vld [vmem:[#allocation5 + $0x68] sm:$0xf]
        %v369 = vld [vmem:[#allocation5 + $0x6c] sm:$0xf]
        %v370 = vld [vmem:[#allocation5 + $0x70] sm:$0xf]
        %v371 = vld [vmem:[#allocation5 + $0x74] sm:$0xf]
        %v372 = vld [vmem:[#allocation5 + $0x78] sm:$0xf]
        %v373 = vld [vmem:[#allocation5 + $0x7c] sm:$0xf]
        %v374 = vld [vmem:[#allocation5 + $0x80] sm:$0xf]
        %v375 = vld [vmem:[#allocation5 + $0x84] sm:$0xf]
        %v376 = vld [vmem:[#allocation5 + $0x88] sm:$0xf]
        %v377 = vld [vmem:[#allocation5 + $0x8c] sm:$0xf]
        %v378 = vld [vmem:[#allocation5 + $0x90] sm:$0xf]
        %v379 = vld [vmem:[#allocation5 + $0x94] sm:$0xf]
        %v380 = vld [vmem:[#allocation5 + $0x98] sm:$0xf]
        %v381 = vld [vmem:[#allocation5 + $0x9c] sm:$0xf]
        %v382 = vld [vmem:[#allocation5 + $0xa0] sm:$0xf]
        %v383 = vld [vmem:[#allocation5 + $0xa4] sm:$0xf]
        %v384 = vld [vmem:[#allocation5 + $0xa8] sm:$0xf]
        %v385 = vld [vmem:[#allocation5 + $0xac] sm:$0xf]
        %v386 = vld [vmem:[#allocation5 + $0xb0] sm:$0xf]
        %v387 = vld [vmem:[#allocation5 + $0xb4] sm:$0xf]
        %v388 = vld [vmem:[#allocation5 + $0xb8] sm:$0xf]
        %v389 = vld [vmem:[#allocation5 + $0xbc] sm:$0xf]
        %v390 = vld [vmem:[%s2] sm:$0x1]
        %v392 = vlaneseq
        %v393 = vshrl.u32 %v392, 7
        %v394 = vsub.s32 0, %v393
        %v395 = vrot.slane %v390, %v394
        %v445 = vunpack.c.l.b16 %v342
        %v446 = vunpack.c.l.b16 %v343
        %v447 = vunpack.c.l.b16 %v344
        %v448 = vunpack.c.l.b16 %v345
        %v449 = vunpack.c.l.b16 %v346
        %v450 = vunpack.c.l.b16 %v347
        %v451 = vunpack.c.l.b16 %v348
        %v452 = vunpack.c.l.b16 %v349
        %v453 = vunpack.c.l.b16 %v350
        %v454 = vunpack.c.l.b16 %v351
        %v455 = vunpack.c.l.b16 %v352
        %v456 = vunpack.c.l.b16 %v353
        %v457 = vunpack.c.l.b16 %v354
        %v458 = vunpack.c.l.b16 %v355
        %v459 = vunpack.c.l.b16 %v356
        %v460 = vunpack.c.l.b16 %v357
        %v461 = vunpack.c.l.b16 %v358
        %v462 = vunpack.c.l.b16 %v359
        %v463 = vunpack.c.l.b16 %v360
        %v464 = vunpack.c.l.b16 %v361
        %v465 = vunpack.c.l.b16 %v362
        %v466 = vunpack.c.l.b16 %v363
        %v467 = vunpack.c.l.b16 %v364
        %v468 = vunpack.c.l.b16 %v365
        %v469 = vunpack.c.l.b16 %v366
        %v470 = vunpack.c.l.b16 %v367
        %v471 = vunpack.c.l.b16 %v368
        %v472 = vunpack.c.l.b16 %v369
        %v473 = vunpack.c.l.b16 %v370
        %v474 = vunpack.c.l.b16 %v371
        %v475 = vunpack.c.l.b16 %v372
        %v476 = vunpack.c.l.b16 %v373
        %v477 = vunpack.c.l.b16 %v374
        %v478 = vunpack.c.l.b16 %v375
        %v479 = vunpack.c.l.b16 %v376
        %v480 = vunpack.c.l.b16 %v377
        %v481 = vunpack.c.l.b16 %v378
        %v482 = vunpack.c.l.b16 %v379
        %v483 = vunpack.c.l.b16 %v380
        %v484 = vunpack.c.l.b16 %v381
        %v485 = vunpack.c.l.b16 %v382
        %v486 = vunpack.c.l.b16 %v383
        %v487 = vunpack.c.l.b16 %v384
        %v488 = vunpack.c.l.b16 %v385
        %v489 = vunpack.c.l.b16 %v386
        %v490 = vunpack.c.l.b16 %v387
        %v491 = vunpack.c.l.b16 %v388
        %v492 = vunpack.c.l.b16 %v389
        %v493 = vpack.c.b16 %v446, %v445
        %v494 = vpack.c.b16 %v448, %v447
        %v495 = vpack.c.b16 %v450, %v449
        %v496 = vpack.c.b16 %v452, %v451
        %v497 = vpack.c.b16 %v454, %v453
        %v498 = vpack.c.b16 %v456, %v455
        %v499 = vpack.c.b16 %v458, %v457
        %v500 = vpack.c.b16 %v460, %v459
        %v501 = vpack.c.b16 %v462, %v461
        %v502 = vpack.c.b16 %v464, %v463
        %v503 = vpack.c.b16 %v466, %v465
        %v504 = vpack.c.b16 %v468, %v467
        %v505 = vpack.c.b16 %v470, %v469
        %v506 = vpack.c.b16 %v472, %v471
        %v507 = vpack.c.b16 %v474, %v473
        %v508 = vpack.c.b16 %v476, %v475
        %v509 = vpack.c.b16 %v478, %v477
        %v510 = vpack.c.b16 %v480, %v479
        %v511 = vpack.c.b16 %v482, %v481
        %v512 = vpack.c.b16 %v484, %v483
        %v513 = vpack.c.b16 %v486, %v485
        %v514 = vpack.c.b16 %v488, %v487
        %v515 = vpack.c.b16 %v490, %v489
        %v516 = vpack.c.b16 %v492, %v491
        %541 = vmatprep.subr.bf16.mxu0 0
        %542 = vmatpush1.bf16.msra.mxu0 %v493
        %543 = vmatprep.subr.bf16.mxu0 0
        %544 = vmatpush1.bf16.msra.mxu0 %v494
        %545 = vmatprep.subr.bf16.mxu0 0
        %546 = vmatpush1.bf16.msra.mxu0 %v495
        %547 = vmatprep.subr.bf16.mxu0 0
        %548 = vmatpush1.bf16.msra.mxu0 %v496
        %549 = vmatprep.subr.bf16.mxu0 0
        %550 = vmatpush1.bf16.msra.mxu0 %v497
        %551 = vmatprep.subr.bf16.mxu0 0
        %552 = vmatpush1.bf16.msra.mxu0 %v498
        %553 = vmatprep.subr.bf16.mxu0 0
        %554 = vmatpush1.bf16.msra.mxu0 %v499
        %555 = vmatprep.subr.bf16.mxu0 0
        %556 = vmatpush1.bf16.msra.mxu0 %v500
        %557 = vmatprep.subr.bf16.mxu0 0
        %558 = vmatpush1.bf16.msra.mxu0 %v501
        %559 = vmatprep.subr.bf16.mxu0 0
        %560 = vmatpush1.bf16.msra.mxu0 %v502
        %561 = vmatprep.subr.bf16.mxu0 0
        %562 = vmatpush1.bf16.msra.mxu0 %v503
        %563 = vmatprep.subr.bf16.mxu0 0
        %564 = vmatpush1.bf16.msra.mxu0 %v504
        %565 = vmatprep.subr.bf16.mxu0 0
        %566 = vmatpush1.bf16.msra.mxu0 %v505
        %567 = vmatprep.subr.bf16.mxu0 0
        %568 = vmatpush1.bf16.msra.mxu0 %v506
        %569 = vmatprep.subr.bf16.mxu0 0
        %570 = vmatpush1.bf16.msra.mxu0 %v507
        %571 = vmatprep.subr.bf16.mxu0 0
        %572 = vmatpush1.bf16.msra.mxu0 %v508
        %573 = vmatprep.mubr.bf16.mxu0 %v337
        %574 = vmatmul.mubr.bf16.gmra.mrb[0].mxu0 %v336
        %v575 = vpop.f32.mrb[0].mxu0
        %v576 = vadd.f32 %v395, %v575
        %v577 = vpop.f32.mrb[0].mxu0
        %v578 = vpop.f32.mrb[0].mxu0
        %v579 = vadd.f32 %v395, %v578
        %v580 = vpop.f32.mrb[0].mxu0
        %581 = vmatprep.mubr.bf16.mxu0 %v340
        %582 = vmatmul.mubr.bf16.gmra.mrb[0].mxu0 %v339
        %v583 = vpop.f32.mrb[0].mxu0
        %v584 = vadd.f32 %v395, %v583
        %v585 = vpop.f32.mrb[0].mxu0
        %v586 = vpop.f32.mrb[0].mxu0
        %v587 = vadd.f32 %v395, %v586
        %v588 = vpop.f32.mrb[0].mxu0
        %589 = vdwg.mxu0
        %590 = vmatprep.subr.bf16.mxu0 0
        %591 = vmatpush1.bf16.msra.mxu0 %v509
        %592 = vmatprep.subr.bf16.mxu0 0
        %593 = vmatpush1.bf16.msra.mxu0 %v510
        %594 = vmatprep.subr.bf16.mxu0 0
        %595 = vmatpush1.bf16.msra.mxu0 %v511
        %596 = vmatprep.subr.bf16.mxu0 0
        %597 = vmatpush1.bf16.msra.mxu0 %v512
        %598 = vmatprep.subr.bf16.mxu0 0
        %599 = vmatpush1.bf16.msra.mxu0 %v513
        %600 = vmatprep.subr.bf16.mxu0 0
        %601 = vmatpush1.bf16.msra.mxu0 %v514
        %602 = vmatprep.subr.bf16.mxu0 0
        %603 = vmatpush1.bf16.msra.mxu0 %v515
        %604 = vmatprep.subr.bf16.mxu0 0
        %605 = vmatpush1.bf16.msra.mxu0 %v516
        %606 = vmatprep.subr.bf16.mxu0 0
        %607 = vmatpush1.bf16.msra.mxu0 0
        %608 = vmatprep.subr.bf16.mxu0 0
        %609 = vmatpush1.bf16.msra.mxu0 0
        %610 = vmatprep.subr.bf16.mxu0 0
        %611 = vmatpush1.bf16.msra.mxu0 0
        %612 = vmatprep.subr.bf16.mxu0 0
        %613 = vmatpush1.bf16.msra.mxu0 0
        %614 = vmatprep.subr.bf16.mxu0 0
        %615 = vmatpush1.bf16.msra.mxu0 0
        %616 = vmatprep.subr.bf16.mxu0 0
        %617 = vmatpush1.bf16.msra.mxu0 0
        %618 = vmatprep.subr.bf16.mxu0 0
        %619 = vmatpush1.bf16.msra.mxu0 0
        %620 = vmatprep.subr.bf16.mxu0 0
        %621 = vmatpush1.bf16.msra.mxu0 0
        %622 = vmatprep.mubr.bf16.mxu0 0
        %623 = vmatmul.mubr.bf16.gmra.mrb[0].mxu0 %v338
        %v624 = vpop.f32.mrb[0].mxu0
        %v625 = vadd.f32 %v576, %v624
        %v626 = vpop.f32.mrb[0].mxu0
        %v627 = vpop.f32.mrb[0].mxu0
        %v628 = vadd.f32 %v579, %v627
        %v629 = vpop.f32.mrb[0].mxu0
        %630 = vmatprep.mubr.bf16.mxu0 0
        %631 = vmatmul.mubr.bf16.gmra.mrb[0].mxu0 %v341
        %v632 = vpop.f32.mrb[0].mxu0
        %v633 = vadd.f32 %v584, %v632
        %v634 = vpop.f32.mrb[0].mxu0
        %v635 = vpop.f32.mrb[0].mxu0
        %v636 = vadd.f32 %v587, %v635
        %v637 = vpop.f32.mrb[0].mxu0
        %638 = vdwg.mxu0
        %v639 = vpack.c.bf16 %v628, %v625
        %v640 = vpack.c.bf16 %v636, %v633
        %v643 = vunpack.c.l.b16 %v639
        %v644 = vunpack.c.h.b16 %v639
        %v645 = vunpack.c.l.b16 %v640
        %v646 = vunpack.c.h.b16 %v640
        %v647 = vpack.c.b16 %v643, %v643
        %v648 = vpack.c.b16 %v644, %v644
        %v649 = vpack.c.b16 %v645, %v645
        %v650 = vpack.c.b16 %v646, %v646
        %655 = vst [vmem:[%s234] sm:$0xf] %v647
        %656 = vst [vmem:[%s234 + $0x4] sm:$0xf] %v648
        %657 = vst [vmem:[%s234 + $0x8] sm:$0xf] %v649
        %658 = vst [vmem:[%s234 + $0xc] sm:$0xf] %v650
        %v659 = vadd.f32 %v625, %v628
        %v660 = vadd.f32 %v659, %v633
        %v661 = vadd.f32 %v660, %v636
        %v662 = vrot.slane %v661, 4
        %v663 = vadd.f32 %v661, %v662
        %v664 = vrot.slane %v663, 2
        %v665 = vadd.f32 %v663, %v664
        %v666 = vrot.slane %v665, 1
        %v667 = vadd.f32 %v665, %v666
        %v668 = vmul.f32 %v625, %v625
        %v669 = vmul.f32 %v628, %v628
        %v670 = vmul.f32 %v633, %v633
        %v671 = vmul.f32 %v636, %v636
        %v672 = vadd.f32 %v668, %v669
        %v673 = vadd.f32 %v672, %v670
        %v674 = vadd.f32 %v673, %v671
        %v675 = vrot.slane %v674, 4
        %v676 = vadd.f32 %v674, %v675
        %v677 = vrot.slane %v676, 2
        %v678 = vadd.f32 %v676, %v677
        %v679 = vrot.slane %v678, 1
        %v680 = vadd.f32 %v678, %v679
        %vm681 = vcmp.eq.s32.totalorder %v254, 0
        %vm682 = vcmp.eq.s32.totalorder %v254, 1
        %v683 = vsel %vm682, %v680, 0.0
        %v684 = vsel %vm681, %v667, %v683
        %685 = vst [vmem:[%s241] sm:$0xff] %v684
        %s686 = sand.u32 %s102, 1
        %s687 = scalar_lea.sflag [#allocation4], %s686
        %s688 = sand.u32 %s102, 1
        %s689 = smul.addr %s688, 16
        %s690 = scalar_lea.vmem [#allocation7], %s689
        %s691 = sand.u32 %s128, 1
        %s692 = scalar_lea.sflag [#allocation9], %s691
        %s693 = sand.u32 %s128, 1
        %s694 = smul.addr %s693, 8
        %s695 = scalar_lea.vmem [#allocation8], %s694
        // Predicated region
        $region41: #{tpu_custom_call.1} parent=31 // pred_check
          %p696 = pneg %p112
        $region42: #{tpu_custom_call.1} parent=31 // pred_check_branch
          %698 = sbr.rel (%p696) target = $region44
        $region43: #{tpu_custom_call.1} parent=31 // pred_region
          %s699 = smul.u32 4, %s26
          %s701 = ssub.s32 256, 256
          %702 = vsyncadd %s687, %s701
          %s703 = smul.addr %s699, 64
          %s704 = scalar_lea.hbm %s3, %s703
          %s705 = sshll.u32 %s690, 4
          %s706 = int_to_ptr.vmem [resolvable:$true] %s705
          %711 = dma.vmem_to_hbm [thread:$0]  %s706, 256, %s704, %s687, 64, 64, 4
        $region44: #{tpu_custom_call.1} parent=31 // pred_fallthru
          _
        // Predicated region
        $region45: #{tpu_custom_call.1} parent=31 // pred_check
          %p712 = pneg %p138
        $region46: #{tpu_custom_call.1} parent=31 // pred_check_branch
          %714 = sbr.rel (%p712) target = $region48
        $region47: #{tpu_custom_call.1} parent=31 // pred_region
          %s716 = ssub.s32 128, 128
          %717 = vsyncadd %s692, %s716
          %s718 = smul.addr %s26, 128
          %s719 = scalar_lea.hbm %s4, %s718
          %s721 = sshll.u32 %s695, 4
          %s722 = int_to_ptr.vmem [resolvable:$true] %s721
          %724 = dma.vmem_to_hbm [thread:$0]  %s722, 128, %s719, %s692
        $region48: #{tpu_custom_call.1} parent=31 // pred_fallthru
          _
      $region32: #{tpu_custom_call.1} parent=5 // pred_fallthru
        _
      %p725 = scmp.le.s32.totalorder 2, %s21
      // Predicated region
      $region49: #{tpu_custom_call.1} parent=5 // pred_check
        %p726 = pneg %p725
      $region50: #{tpu_custom_call.1} parent=5 // pred_check_branch
        %728 = sbr.rel (%p726) target = $region52
      $region51: #{tpu_custom_call.1} parent=5 // pred_region
        %s729 = ssub.s32 %s21, 2
        // Predicated region
        $region53: #{tpu_custom_call.1} parent=51 // pred_check
          %p730 = pneg %p118
        $region54: #{tpu_custom_call.1} parent=51 // pred_check_branch
          %732 = sbr.rel (%p730) target = $region56
        $region55: #{tpu_custom_call.1} parent=51 // pred_region
          %s733 = sand.u32 %s103, 1
          %s734 = scalar_lea.sflag [#allocation4], %s733
          %s735 = sand.u32 %s103, 1
          %s736 = smul.addr %s735, 16
          %s737 = scalar_lea.vmem [#allocation7], %s736
          %738 = dma.done %s734, 256
        $region56: #{tpu_custom_call.1} parent=51 // pred_fallthru
          _
        // Predicated region
        $region57: #{tpu_custom_call.1} parent=51 // pred_check
          %p739 = pneg %p144
        $region58: #{tpu_custom_call.1} parent=51 // pred_check_branch
          %741 = sbr.rel (%p739) target = $region60
        $region59: #{tpu_custom_call.1} parent=51 // pred_region
          %s742 = sand.u32 %s129, 1
          %s743 = scalar_lea.sflag [#allocation9], %s742
          %s744 = sand.u32 %s129, 1
          %s745 = smul.addr %s744, 8
          %s746 = scalar_lea.vmem [#allocation8], %s745
          %747 = dma.done %s743, 128
        $region60: #{tpu_custom_call.1} parent=51 // pred_fallthru
          _
      $region52: #{tpu_custom_call.1} parent=5 // pred_fallthru
        _
    $region6: #{tpu_custom_call.1} parent=1 // loop_footer
      %s25 = sadd.s32 1, %s21
    $region7: #{tpu_custom_call.1} parent=1 // loop_footer_branch
      %20 = sbr.rel target = $region3
    $region8: #{tpu_custom_call.1} parent=1 // loop_exit
      _
    %748 = vsyncpa [#allocation3], 1
    %s749 = scalar_lea.sflag [#allocation3], 1
    %750 = vsyncpa %s749, 1
    %751 = vsyncpa [#allocation6], 1
    %752 = vsyncpa [#allocation4], 1
    %s753 = scalar_lea.sflag [#allocation4], 1
    %754 = vsyncpa %s753, 1
    %755 = vsyncpa [#allocation9], 1
    %s756 = scalar_lea.sflag [#allocation9], 1
    %757 = vsyncpa %s756, 1

</llo_original>
